<compile_context>
chip_gen: v7x
topology: tpu7x:2x2x1
jax: 0.10.0
libtpu: 0.0.40
codegen_flags: <defaults>
</compile_context>

<pallas_src>
import jax
import jax.numpy as jnp
from jax import lax
from jax.experimental import pallas as pl
from jax.experimental.pallas import tpu as pltpu

N_LAYERS = 4          # Linear(3,5) -> Linear(5,5) -> Linear(5,5) -> Linear(5,3)
FP = 8                # padded feature dim (sublane-aligned); row FP-1 holds biases
D_IN = 3
D_OUT = 3
LANE_REP = 128        # host-side lane replication of weight scalars
CHUNK = 128           # lanes processed per inner-loop step (== LANE_REP)

# Statically-known non-zero weight rows per layer (k = input-feature index).
LAYER_KS = ((0, 1, 2), (0, 1, 2, 3, 4), (0, 1, 2, 3, 4), (0, 1, 2, 3, 4))


def _round_up(v, m):
    return (v + m - 1) // m * m


def _make_mlp_kernel(n_chunks):
    """Kernel over one (D_IN, tb) activation tile; tb = n_chunks * CHUNK lanes."""

    def kernel(x_ref, w_ref, o_ref):
        # Hoist the 22 used weight/bias tiles (each (FP, CHUNK) = 1 vreg) above
        # the chunk loop; they stay resident while the loop does pure VALU work.
        w_bias = [w_ref[l, FP - 1, :, :] for l in range(N_LAYERS)]
        w_cols = [[w_ref[l, k, :, :] for k in LAYER_KS[l]] for l in range(N_LAYERS)]

        def chunk_body(j, carry):
            off = pl.multiple_of(j * CHUNK, CHUNK)
            h = x_ref[:, pl.ds(off, CHUNK)]                 # (D_IN, CHUNK)
            for l in range(N_LAYERS):
                acc = w_bias[l]                             # bias-initialized (FP, CHUNK)
                for i, k in enumerate(LAYER_KS[l]):
                    # (FP, CHUNK) lane-replicated weight * sublane-broadcast x row
                    acc = acc + w_cols[l][i] * h[k:k + 1, :]
                h = jnp.maximum(acc, 0.0) if l < N_LAYERS - 1 else acc
            o_ref[:, pl.ds(off, CHUNK)] = h[:D_OUT, :]      # lane-dense (3, CHUNK) store
            return carry

        lax.fori_loop(0, n_chunks, chunk_body, 0, unroll=min(4, n_chunks))

    return kernel


def dnn_forward_fb(x_fb, w_pack, *, block_batch=8192):
    """Core entry point.  x_fb: (3, batch) float32 (features-by-batch).
    w_pack: (4, 8, 8, 128) packed weight/bias slab.  Returns (3, batch)."""
    x_fb = jnp.asarray(x_fb, jnp.float32)
    d_in, batch = x_fb.shape
    assert d_in == D_IN

    bp128 = _round_up(max(batch, 1), CHUNK)
    # Batch tile: multiple of 128, capped at block_batch.
    tb = max(CHUNK, min(block_batch, bp128) // CHUNK * CHUNK)
    # v7x: keep >= 2 grid steps when possible so the "parallel" axis can shard
    # across both TensorCores (no-op on single-TC v5e/v6e).
    if bp128 // tb < 2 and bp128 >= 2 * CHUNK:
        tb = max(CHUNK, (bp128 // 2) // CHUNK * CHUNK)
    bp = _round_up(bp128, tb)

    x_pad = x_fb if bp == batch else jnp.pad(x_fb, ((0, 0), (0, bp - batch)))

    out = pl.pallas_call(
        _make_mlp_kernel(tb // CHUNK),
        out_shape=jax.ShapeDtypeStruct((D_OUT, bp), jnp.float32),
        grid=(bp // tb,),
        in_specs=[
            pl.BlockSpec((D_IN, tb), lambda i: (0, i)),                     # activations
            pl.BlockSpec((N_LAYERS, FP, FP, LANE_REP), lambda i: (0, 0, 0, 0)),  # resident weights
        ],
        out_specs=pl.BlockSpec((D_OUT, tb), lambda i: (0, i)),
        compiler_params=pltpu.CompilerParams(
            dimension_semantics=("parallel",)),
    )(x_pad, w_pack)

    return out[:, :batch]


def dnn_forward(x, w_pack, *, block_batch=8192):
    """PyTorch convention: x (batch, 3) -> (batch, 3)."""
    x = jnp.asarray(x, jnp.float32)
    return dnn_forward_fb(x.T, w_pack, block_batch=block_batch).T


def init_params(key):
    """PyTorch-convention params: weight (out, in), bias (out,), default uniform init."""
    dims = [(3, 5), (5, 5), (5, 5), (5, 3)]
    params = {}
    keys = jax.random.split(key, 2 * len(dims))
    for i, (fan_in, fan_out) in enumerate(dims):
        bound = 1.0 / (fan_in ** 0.5)
        w = jax.random.uniform(keys[2 * i], (fan_out, fan_in),
                               minval=-bound, maxval=bound, dtype=jnp.float32)
        b = jax.random.uniform(keys[2 * i + 1], (fan_out,),
                               minval=-bound, maxval=bound, dtype=jnp.float32)
        params[f"w{i + 1}"] = w
        params[f"b{i + 1}"] = b
    return params


def pack_params(params):
    """Fold weights+biases into one zero-padded (4, 8, 8, 128) f32 slab.

    slab[l, k, n, :] = W_l[n, k]   for k < in_features, n < out_features
    slab[l, 7, n, :] = b_l[n]      (bias row, used to initialize the accumulator)
    Every scalar is replicated across the 128 lanes so in-kernel multiplies need
    no lane-broadcast.
    """
    wp = jnp.zeros((N_LAYERS, FP, FP, LANE_REP), jnp.float32)
    for l in range(N_LAYERS):
        w = jnp.asarray(params[f"w{l + 1}"], jnp.float32)   # (out, in)
        b = jnp.asarray(params[f"b{l + 1}"], jnp.float32)   # (out,)
        out_f, in_f = w.shape
        wp = wp.at[l, :in_f, :out_f, :].set(
            jnp.broadcast_to(w.T[:, :, None], (in_f, out_f, LANE_REP)))
        wp = wp.at[l, FP - 1, :out_f, :].set(
            jnp.broadcast_to(b[:, None], (out_f, LANE_REP)))
    return wp


def dnn_reference(x, params):
    """Pure-JAX reference (PyTorch semantics: y = x @ W.T + b)."""
    h = x
    for l in (1, 2, 3):
        h = jnp.maximum(h @ params[f"w{l}"].T + params[f"b{l}"], 0.0)
    return h @ params["w4"].T + params["b4"]


if __name__ == "__main__":
    key = jax.random.PRNGKey(0)
    k_params, k_x1, k_x2 = jax.random.split(key, 3)

    params = init_params(k_params)
    w_pack = pack_params(params)

    # Primary small check (batch=8): single grid step, single chunk.
    batch = 8
    x = jax.random.normal(k_x1, (batch, D_IN), dtype=jnp.float32)
    y = dnn_forward(x, w_pack)
    jax.block_until_ready(y)
    y_ref = dnn_reference(x, params)
    assert y.shape == (batch, D_OUT)
    assert jnp.allclose(y, y_ref, atol=1e-5, rtol=1e-4), "mismatch vs reference (batch=8)"

    # Secondary check exercising grid > 1, batch padding and the in-kernel chunk loop.
    batch2 = 1000
    x2 = jax.random.normal(k_x2, (batch2, D_IN), dtype=jnp.float32)
    y2 = dnn_forward(x2, w_pack)
    jax.block_until_ready(y2)
    y2_ref = dnn_reference(x2, params)
    assert y2.shape == (batch2, D_OUT)
    assert jnp.allclose(y2, y2_ref, atol=1e-5, rtol=1e-4), "mismatch vs reference (batch=1000)"

    print("KERNEL_OK")
</pallas_src>

<mosaic_0001>
module attributes {stable_mosaic.version = 11 : i64} {
  func.func @kernel(%arg0: i32, %arg1: memref<3x128xf32, #tpu.memory_space<vmem>>, %arg2: memref<4x8x8x128xf32, #tpu.memory_space<vmem>>, %arg3: memref<3x128xf32, #tpu.memory_space<vmem>>) attributes {dimension_semantics = [#tpu.dimension_semantics<parallel>], iteration_bounds = array<i64: 1>, scalar_prefetch = 0 : i64, scratch_operands = 0 : i64, tpu.core_type = #tpu.core_type<tc>, window_params = [{transform_indices = @transform_0, window_bounds = array<i64: 3, 128>}, {pipeline_mode = #tpu.pipeline_mode<synchronous>, transform_indices = @transform_1, window_bounds = array<i64: 4, 8, 8, 128>}, {transform_indices = @transform_2, window_bounds = array<i64: 3, 128>}]} {
    %c0 = arith.constant 0 : index
    %c7 = arith.constant 7 : index
    %c0_0 = arith.constant 0 : index
    %c0_1 = arith.constant 0 : index
    %0 = vector.load %arg2[%c0, %c7, %c0_0, %c0_1] : memref<4x8x8x128xf32, #tpu.memory_space<vmem>>, vector<1x1x8x128xf32>
    %1 = vector.shape_cast %0 : vector<1x1x8x128xf32> to vector<8x128xf32>
    %c1 = arith.constant 1 : index
    %c7_2 = arith.constant 7 : index
    %c0_3 = arith.constant 0 : index
    %c0_4 = arith.constant 0 : index
    %2 = vector.load %arg2[%c1, %c7_2, %c0_3, %c0_4] : memref<4x8x8x128xf32, #tpu.memory_space<vmem>>, vector<1x1x8x128xf32>
    %3 = vector.shape_cast %2 : vector<1x1x8x128xf32> to vector<8x128xf32>
    %c2 = arith.constant 2 : index
    %c7_5 = arith.constant 7 : index
    %c0_6 = arith.constant 0 : index
    %c0_7 = arith.constant 0 : index
    %4 = vector.load %arg2[%c2, %c7_5, %c0_6, %c0_7] : memref<4x8x8x128xf32, #tpu.memory_space<vmem>>, vector<1x1x8x128xf32>
    %5 = vector.shape_cast %4 : vector<1x1x8x128xf32> to vector<8x128xf32>
    %c3 = arith.constant 3 : index
    %c7_8 = arith.constant 7 : index
    %c0_9 = arith.constant 0 : index
    %c0_10 = arith.constant 0 : index
    %6 = vector.load %arg2[%c3, %c7_8, %c0_9, %c0_10] : memref<4x8x8x128xf32, #tpu.memory_space<vmem>>, vector<1x1x8x128xf32>
    %7 = vector.shape_cast %6 : vector<1x1x8x128xf32> to vector<8x128xf32>
    %c0_11 = arith.constant 0 : index
    %c0_12 = arith.constant 0 : index
    %c0_13 = arith.constant 0 : index
    %c0_14 = arith.constant 0 : index
    %8 = vector.load %arg2[%c0_11, %c0_12, %c0_13, %c0_14] : memref<4x8x8x128xf32, #tpu.memory_space<vmem>>, vector<1x1x8x128xf32>
    %9 = vector.shape_cast %8 : vector<1x1x8x128xf32> to vector<8x128xf32>
    %c0_15 = arith.constant 0 : index
    %c1_16 = arith.constant 1 : index
    %c0_17 = arith.constant 0 : index
    %c0_18 = arith.constant 0 : index
    %10 = vector.load %arg2[%c0_15, %c1_16, %c0_17, %c0_18] : memref<4x8x8x128xf32, #tpu.memory_space<vmem>>, vector<1x1x8x128xf32>
    %11 = vector.shape_cast %10 : vector<1x1x8x128xf32> to vector<8x128xf32>
    %c0_19 = arith.constant 0 : index
    %c2_20 = arith.constant 2 : index
    %c0_21 = arith.constant 0 : index
    %c0_22 = arith.constant 0 : index
    %12 = vector.load %arg2[%c0_19, %c2_20, %c0_21, %c0_22] : memref<4x8x8x128xf32, #tpu.memory_space<vmem>>, vector<1x1x8x128xf32>
    %13 = vector.shape_cast %12 : vector<1x1x8x128xf32> to vector<8x128xf32>
    %c1_23 = arith.constant 1 : index
    %c0_24 = arith.constant 0 : index
    %c0_25 = arith.constant 0 : index
    %c0_26 = arith.constant 0 : index
    %14 = vector.load %arg2[%c1_23, %c0_24, %c0_25, %c0_26] : memref<4x8x8x128xf32, #tpu.memory_space<vmem>>, vector<1x1x8x128xf32>
    %15 = vector.shape_cast %14 : vector<1x1x8x128xf32> to vector<8x128xf32>
    %c1_27 = arith.constant 1 : index
    %c1_28 = arith.constant 1 : index
    %c0_29 = arith.constant 0 : index
    %c0_30 = arith.constant 0 : index
    %16 = vector.load %arg2[%c1_27, %c1_28, %c0_29, %c0_30] : memref<4x8x8x128xf32, #tpu.memory_space<vmem>>, vector<1x1x8x128xf32>
    %17 = vector.shape_cast %16 : vector<1x1x8x128xf32> to vector<8x128xf32>
    %c1_31 = arith.constant 1 : index
    %c2_32 = arith.constant 2 : index
    %c0_33 = arith.constant 0 : index
    %c0_34 = arith.constant 0 : index
    %18 = vector.load %arg2[%c1_31, %c2_32, %c0_33, %c0_34] : memref<4x8x8x128xf32, #tpu.memory_space<vmem>>, vector<1x1x8x128xf32>
    %19 = vector.shape_cast %18 : vector<1x1x8x128xf32> to vector<8x128xf32>
    %c1_35 = arith.constant 1 : index
    %c3_36 = arith.constant 3 : index
    %c0_37 = arith.constant 0 : index
    %c0_38 = arith.constant 0 : index
    %20 = vector.load %arg2[%c1_35, %c3_36, %c0_37, %c0_38] : memref<4x8x8x128xf32, #tpu.memory_space<vmem>>, vector<1x1x8x128xf32>
    %21 = vector.shape_cast %20 : vector<1x1x8x128xf32> to vector<8x128xf32>
    %c1_39 = arith.constant 1 : index
    %c4 = arith.constant 4 : index
    %c0_40 = arith.constant 0 : index
    %c0_41 = arith.constant 0 : index
    %22 = vector.load %arg2[%c1_39, %c4, %c0_40, %c0_41] : memref<4x8x8x128xf32, #tpu.memory_space<vmem>>, vector<1x1x8x128xf32>
    %23 = vector.shape_cast %22 : vector<1x1x8x128xf32> to vector<8x128xf32>
    %c2_42 = arith.constant 2 : index
    %c0_43 = arith.constant 0 : index
    %c0_44 = arith.constant 0 : index
    %c0_45 = arith.constant 0 : index
    %24 = vector.load %arg2[%c2_42, %c0_43, %c0_44, %c0_45] : memref<4x8x8x128xf32, #tpu.memory_space<vmem>>, vector<1x1x8x128xf32>
    %25 = vector.shape_cast %24 : vector<1x1x8x128xf32> to vector<8x128xf32>
    %c2_46 = arith.constant 2 : index
    %c1_47 = arith.constant 1 : index
    %c0_48 = arith.constant 0 : index
    %c0_49 = arith.constant 0 : index
    %26 = vector.load %arg2[%c2_46, %c1_47, %c0_48, %c0_49] : memref<4x8x8x128xf32, #tpu.memory_space<vmem>>, vector<1x1x8x128xf32>
    %27 = vector.shape_cast %26 : vector<1x1x8x128xf32> to vector<8x128xf32>
    %c2_50 = arith.constant 2 : index
    %c2_51 = arith.constant 2 : index
    %c0_52 = arith.constant 0 : index
    %c0_53 = arith.constant 0 : index
    %28 = vector.load %arg2[%c2_50, %c2_51, %c0_52, %c0_53] : memref<4x8x8x128xf32, #tpu.memory_space<vmem>>, vector<1x1x8x128xf32>
    %29 = vector.shape_cast %28 : vector<1x1x8x128xf32> to vector<8x128xf32>
    %c2_54 = arith.constant 2 : index
    %c3_55 = arith.constant 3 : index
    %c0_56 = arith.constant 0 : index
    %c0_57 = arith.constant 0 : index
    %30 = vector.load %arg2[%c2_54, %c3_55, %c0_56, %c0_57] : memref<4x8x8x128xf32, #tpu.memory_space<vmem>>, vector<1x1x8x128xf32>
    %31 = vector.shape_cast %30 : vector<1x1x8x128xf32> to vector<8x128xf32>
    %c2_58 = arith.constant 2 : index
    %c4_59 = arith.constant 4 : index
    %c0_60 = arith.constant 0 : index
    %c0_61 = arith.constant 0 : index
    %32 = vector.load %arg2[%c2_58, %c4_59, %c0_60, %c0_61] : memref<4x8x8x128xf32, #tpu.memory_space<vmem>>, vector<1x1x8x128xf32>
    %33 = vector.shape_cast %32 : vector<1x1x8x128xf32> to vector<8x128xf32>
    %c3_62 = arith.constant 3 : index
    %c0_63 = arith.constant 0 : index
    %c0_64 = arith.constant 0 : index
    %c0_65 = arith.constant 0 : index
    %34 = vector.load %arg2[%c3_62, %c0_63, %c0_64, %c0_65] : memref<4x8x8x128xf32, #tpu.memory_space<vmem>>, vector<1x1x8x128xf32>
    %35 = vector.shape_cast %34 : vector<1x1x8x128xf32> to vector<8x128xf32>
    %c3_66 = arith.constant 3 : index
    %c1_67 = arith.constant 1 : index
    %c0_68 = arith.constant 0 : index
    %c0_69 = arith.constant 0 : index
    %36 = vector.load %arg2[%c3_66, %c1_67, %c0_68, %c0_69] : memref<4x8x8x128xf32, #tpu.memory_space<vmem>>, vector<1x1x8x128xf32>
    %37 = vector.shape_cast %36 : vector<1x1x8x128xf32> to vector<8x128xf32>
    %c3_70 = arith.constant 3 : index
    %c2_71 = arith.constant 2 : index
    %c0_72 = arith.constant 0 : index
    %c0_73 = arith.constant 0 : index
    %38 = vector.load %arg2[%c3_70, %c2_71, %c0_72, %c0_73] : memref<4x8x8x128xf32, #tpu.memory_space<vmem>>, vector<1x1x8x128xf32>
    %39 = vector.shape_cast %38 : vector<1x1x8x128xf32> to vector<8x128xf32>
    %c3_74 = arith.constant 3 : index
    %c3_75 = arith.constant 3 : index
    %c0_76 = arith.constant 0 : index
    %c0_77 = arith.constant 0 : index
    %40 = vector.load %arg2[%c3_74, %c3_75, %c0_76, %c0_77] : memref<4x8x8x128xf32, #tpu.memory_space<vmem>>, vector<1x1x8x128xf32>
    %41 = vector.shape_cast %40 : vector<1x1x8x128xf32> to vector<8x128xf32>
    %c3_78 = arith.constant 3 : index
    %c4_79 = arith.constant 4 : index
    %c0_80 = arith.constant 0 : index
    %c0_81 = arith.constant 0 : index
    %42 = vector.load %arg2[%c3_78, %c4_79, %c0_80, %c0_81] : memref<4x8x8x128xf32, #tpu.memory_space<vmem>>, vector<1x1x8x128xf32>
    %43 = vector.shape_cast %42 : vector<1x1x8x128xf32> to vector<8x128xf32>
    %c0_i32 = arith.constant 0 : i32
    %c128_i32 = arith.constant 128 : i32
    %44 = arith.muli %c0_i32, %c128_i32 : i32
    %45 = tpu.assume_multiple %44, 128 : i32
    %c0_82 = arith.constant 0 : index
    %46 = arith.index_cast %45 : i32 to index
    %47 = vector.load %arg1[%c0_82, %46] : memref<3x128xf32, #tpu.memory_space<vmem>>, vector<3x128xf32>
    %48 = vector.extract_strided_slice %47 {offsets = [0, 0], sizes = [1, 128], strides = [1, 1]} : vector<3x128xf32> to vector<1x128xf32>
    %49 = vector.broadcast %48 : vector<1x128xf32> to vector<8x128xf32>
    %50 = arith.mulf %9, %49 : vector<8x128xf32>
    %51 = arith.addf %1, %50 : vector<8x128xf32>
    %52 = vector.extract_strided_slice %47 {offsets = [1, 0], sizes = [1, 128], strides = [1, 1]} : vector<3x128xf32> to vector<1x128xf32>
    %53 = vector.broadcast %52 : vector<1x128xf32> to vector<8x128xf32>
    %54 = arith.mulf %11, %53 : vector<8x128xf32>
    %55 = arith.addf %51, %54 : vector<8x128xf32>
    %56 = vector.extract_strided_slice %47 {offsets = [2, 0], sizes = [1, 128], strides = [1, 1]} : vector<3x128xf32> to vector<1x128xf32>
    %57 = vector.broadcast %56 : vector<1x128xf32> to vector<8x128xf32>
    %58 = arith.mulf %13, %57 : vector<8x128xf32>
    %59 = arith.addf %55, %58 : vector<8x128xf32>
    %cst = arith.constant 0.000000e+00 : f32
    %60 = vector.broadcast %cst : f32 to vector<8x128xf32>
    %61 = arith.maximumf %59, %60 : vector<8x128xf32>
    %62 = vector.extract_strided_slice %61 {offsets = [0, 0], sizes = [1, 128], strides = [1, 1]} : vector<8x128xf32> to vector<1x128xf32>
    %63 = vector.broadcast %62 : vector<1x128xf32> to vector<8x128xf32>
    %64 = arith.mulf %15, %63 : vector<8x128xf32>
    %65 = arith.addf %3, %64 : vector<8x128xf32>
    %66 = vector.extract_strided_slice %61 {offsets = [1, 0], sizes = [1, 128], strides = [1, 1]} : vector<8x128xf32> to vector<1x128xf32>
    %67 = vector.broadcast %66 : vector<1x128xf32> to vector<8x128xf32>
    %68 = arith.mulf %17, %67 : vector<8x128xf32>
    %69 = arith.addf %65, %68 : vector<8x128xf32>
    %70 = vector.extract_strided_slice %61 {offsets = [2, 0], sizes = [1, 128], strides = [1, 1]} : vector<8x128xf32> to vector<1x128xf32>
    %71 = vector.broadcast %70 : vector<1x128xf32> to vector<8x128xf32>
    %72 = arith.mulf %19, %71 : vector<8x128xf32>
    %73 = arith.addf %69, %72 : vector<8x128xf32>
    %74 = vector.extract_strided_slice %61 {offsets = [3, 0], sizes = [1, 128], strides = [1, 1]} : vector<8x128xf32> to vector<1x128xf32>
    %75 = vector.broadcast %74 : vector<1x128xf32> to vector<8x128xf32>
    %76 = arith.mulf %21, %75 : vector<8x128xf32>
    %77 = arith.addf %73, %76 : vector<8x128xf32>
    %78 = vector.extract_strided_slice %61 {offsets = [4, 0], sizes = [1, 128], strides = [1, 1]} : vector<8x128xf32> to vector<1x128xf32>
    %79 = vector.broadcast %78 : vector<1x128xf32> to vector<8x128xf32>
    %80 = arith.mulf %23, %79 : vector<8x128xf32>
    %81 = arith.addf %77, %80 : vector<8x128xf32>
    %cst_83 = arith.constant 0.000000e+00 : f32
    %82 = vector.broadcast %cst_83 : f32 to vector<8x128xf32>
    %83 = arith.maximumf %81, %82 : vector<8x128xf32>
    %84 = vector.extract_strided_slice %83 {offsets = [0, 0], sizes = [1, 128], strides = [1, 1]} : vector<8x128xf32> to vector<1x128xf32>
    %85 = vector.broadcast %84 : vector<1x128xf32> to vector<8x128xf32>
    %86 = arith.mulf %25, %85 : vector<8x128xf32>
    %87 = arith.addf %5, %86 : vector<8x128xf32>
    %88 = vector.extract_strided_slice %83 {offsets = [1, 0], sizes = [1, 128], strides = [1, 1]} : vector<8x128xf32> to vector<1x128xf32>
    %89 = vector.broadcast %88 : vector<1x128xf32> to vector<8x128xf32>
    %90 = arith.mulf %27, %89 : vector<8x128xf32>
    %91 = arith.addf %87, %90 : vector<8x128xf32>
    %92 = vector.extract_strided_slice %83 {offsets = [2, 0], sizes = [1, 128], strides = [1, 1]} : vector<8x128xf32> to vector<1x128xf32>
    %93 = vector.broadcast %92 : vector<1x128xf32> to vector<8x128xf32>
    %94 = arith.mulf %29, %93 : vector<8x128xf32>
    %95 = arith.addf %91, %94 : vector<8x128xf32>
    %96 = vector.extract_strided_slice %83 {offsets = [3, 0], sizes = [1, 128], strides = [1, 1]} : vector<8x128xf32> to vector<1x128xf32>
    %97 = vector.broadcast %96 : vector<1x128xf32> to vector<8x128xf32>
    %98 = arith.mulf %31, %97 : vector<8x128xf32>
    %99 = arith.addf %95, %98 : vector<8x128xf32>
    %100 = vector.extract_strided_slice %83 {offsets = [4, 0], sizes = [1, 128], strides = [1, 1]} : vector<8x128xf32> to vector<1x128xf32>
    %101 = vector.broadcast %100 : vector<1x128xf32> to vector<8x128xf32>
    %102 = arith.mulf %33, %101 : vector<8x128xf32>
    %103 = arith.addf %99, %102 : vector<8x128xf32>
    %cst_84 = arith.constant 0.000000e+00 : f32
    %104 = vector.broadcast %cst_84 : f32 to vector<8x128xf32>
    %105 = arith.maximumf %103, %104 : vector<8x128xf32>
    %106 = vector.extract_strided_slice %105 {offsets = [0, 0], sizes = [1, 128], strides = [1, 1]} : vector<8x128xf32> to vector<1x128xf32>
    %107 = vector.broadcast %106 : vector<1x128xf32> to vector<8x128xf32>
    %108 = arith.mulf %35, %107 : vector<8x128xf32>
    %109 = arith.addf %7, %108 : vector<8x128xf32>
    %110 = vector.extract_strided_slice %105 {offsets = [1, 0], sizes = [1, 128], strides = [1, 1]} : vector<8x128xf32> to vector<1x128xf32>
    %111 = vector.broadcast %110 : vector<1x128xf32> to vector<8x128xf32>
    %112 = arith.mulf %37, %111 : vector<8x128xf32>
    %113 = arith.addf %109, %112 : vector<8x128xf32>
    %114 = vector.extract_strided_slice %105 {offsets = [2, 0], sizes = [1, 128], strides = [1, 1]} : vector<8x128xf32> to vector<1x128xf32>
    %115 = vector.broadcast %114 : vector<1x128xf32> to vector<8x128xf32>
    %116 = arith.mulf %39, %115 : vector<8x128xf32>
    %117 = arith.addf %113, %116 : vector<8x128xf32>
    %118 = vector.extract_strided_slice %105 {offsets = [3, 0], sizes = [1, 128], strides = [1, 1]} : vector<8x128xf32> to vector<1x128xf32>
    %119 = vector.broadcast %118 : vector<1x128xf32> to vector<8x128xf32>
    %120 = arith.mulf %41, %119 : vector<8x128xf32>
    %121 = arith.addf %117, %120 : vector<8x128xf32>
    %122 = vector.extract_strided_slice %105 {offsets = [4, 0], sizes = [1, 128], strides = [1, 1]} : vector<8x128xf32> to vector<1x128xf32>
    %123 = vector.broadcast %122 : vector<1x128xf32> to vector<8x128xf32>
    %124 = arith.mulf %43, %123 : vector<8x128xf32>
    %125 = arith.addf %121, %124 : vector<8x128xf32>
    %126 = vector.extract_strided_slice %125 {offsets = [0, 0], sizes = [3, 128], strides = [1, 1]} : vector<8x128xf32> to vector<3x128xf32>
    %c0_85 = arith.constant 0 : index
    %127 = arith.index_cast %45 : i32 to index
    %128 = vector.load %arg3[%c0_85, %127] : memref<3x128xf32, #tpu.memory_space<vmem>>, vector<3x128xf32>
    tpu.vector_store %arg3[%c0_85, %127], %126 {strides = array<i32>} : memref<3x128xf32, #tpu.memory_space<vmem>>, vector<3x128xf32>,
    %c1_i32 = arith.constant 1 : i32
    return
  }
  func.func @transform_0(%arg0: i32) -> (i32, i32) {
    %c0_i32 = arith.constant 0 : i32
    %c0_i32_0 = arith.constant 0 : i32
    return %c0_i32, %arg0 : i32, i32
  }
  func.func @transform_1(%arg0: i32) -> (i32, i32, i32, i32) {
    %c0_i32 = arith.constant 0 : i32
    %c0_i32_0 = arith.constant 0 : i32
    %c0_i32_1 = arith.constant 0 : i32
    %c0_i32_2 = arith.constant 0 : i32
    %c0_i32_3 = arith.constant 0 : i32
    return %c0_i32, %c0_i32_0, %c0_i32_1, %c0_i32_2 : i32, i32, i32, i32
  }
  func.func @transform_2(%arg0: i32) -> (i32, i32) {
    %c0_i32 = arith.constant 0 : i32
    %c0_i32_0 = arith.constant 0 : i32
    return %c0_i32, %arg0 : i32, i32
  }
}

</mosaic_0001>

<llo_original>
// kernel: tpu_custom_call.1
$region0: #{tpu_custom_call.1}
  #allocation0 [shape = 'u32[]', space=smem, size = 0x4, offset = 0x4, fixed_abs, tag = 'smem constant byte address 0x4 - core index']
  #allocation1 [shape = 'u32[144,128]{1,0:T(1,128)}', space=vmem, size = 0x12000, scoped, tag = 'internal scratch']
  %s0 = inlined_call_operand.hbm [shape: f32[3,128], index: 0, kind: input, shape index: {}]
  %s1 = inlined_call_operand.hbm [shape: f32[4,8,8,128], index: 1, kind: input, shape index: {}]
  %s2 = inlined_call_operand.hbm [shape: f32[3,128], index: 2, kind: output, shape index: {}]
  %s3 = sld [smem:[#allocation0]]
  $region26: #{tpu_custom_call.1} parent=0
    _
  %s5 = ssub.s32 1, %s3
  %s6 = scalar_select 0, %s5, %s3
  $region1: #{tpu_custom_call.1} parent=0
    #allocation2 [shape = 'u8[2048]{0}', space=vmem, size = 0x800, scoped, tag = 'input window, operand 0, single buffered']
    #allocation3 [shape = 's32[1]{0}', space=sflag, size = 0x4, scoped, tag = 'scoped memory for tpu_custom_call.1']
    #allocation4 [shape = 's32[1]{0}', space=sflag, size = 0x4, scoped, tag = 'scoped memory for tpu_custom_call.1']
    #allocation5 [shape = 'u8[131072]{0}', space=vmem, size = 0x20000, scoped, tag = 'input window, operand 1, single buffered']
    #allocation6 [shape = 's32[1]{0}', space=sflag, size = 0x4, scoped, tag = 'scoped memory for tpu_custom_call.1']
    #allocation7 [shape = 'u8[2048]{0}', space=vmem, size = 0x800, scoped, tag = 'output window, operand 0, single buffered']
    %7 = vsyncpa [#allocation3], 0
    %8 = vsyncpa [#allocation6], 0
    %9 = vsyncpa [#allocation4], 0
    // Predicated region
    $region2: #{tpu_custom_call.1} parent=1 // pred_check
      _
    $region3: #{tpu_custom_call.1} parent=1 // pred_check_branch
      %11 = sbr.rel (0) target = $region5
    $region4: #{tpu_custom_call.1} parent=1 // pred_region
      %s13 = ssub.s32 64, 64
      %14 = vsyncadd [#allocation3], %s13
      %s16 = sshll.u32 [#allocation2], 4
      %s17 = int_to_ptr.vmem [resolvable:$true] %s16
      %19 = dma.hbm_to_vmem [thread:$0]  %s0, 64, %s17, [#allocation3]
    $region5: #{tpu_custom_call.1} parent=1 // pred_fallthru
      _
    // Predicated region
    $region6: #{tpu_custom_call.1} parent=1 // pred_check
      _
    $region7: #{tpu_custom_call.1} parent=1 // pred_check_branch
      %21 = sbr.rel (0) target = $region9
    $region8: #{tpu_custom_call.1} parent=1 // pred_region
      %s23 = ssub.s32 4096, 4096
      %24 = vsyncadd [#allocation6], %s23
      %s25 = sshll.u32 [#allocation5], 4
      %s26 = int_to_ptr.vmem [resolvable:$true] %s25
      %31 = dma.hbm_to_vmem [thread:$0]  %s1, 4096, %s26, [#allocation6], 128, 128, 8
    $region9: #{tpu_custom_call.1} parent=1 // pred_fallthru
      _
    // Predicated region
    $region10: #{tpu_custom_call.1} parent=1 // pred_check
      _
    $region11: #{tpu_custom_call.1} parent=1 // pred_check_branch
      %33 = sbr.rel (0) target = $region13
    $region12: #{tpu_custom_call.1} parent=1 // pred_region
      %34 = dma.done [#allocation3], 64
    $region13: #{tpu_custom_call.1} parent=1 // pred_fallthru
      _
    // Predicated region
    $region14: #{tpu_custom_call.1} parent=1 // pred_check
      _
    $region15: #{tpu_custom_call.1} parent=1 // pred_check_branch
      %36 = sbr.rel (0) target = $region17
    $region16: #{tpu_custom_call.1} parent=1 // pred_region
      %37 = dma.done [#allocation6], 4096
    $region17: #{tpu_custom_call.1} parent=1 // pred_fallthru
      _
    %s38 = scalar_lea.vmem [#allocation5], 56
    %v39 = vld [vmem:[%s38] sm:$0xff]
    %s40 = scalar_lea.vmem [#allocation5], 120
    %v41 = vld [vmem:[%s40] sm:$0xff]
    %s42 = scalar_lea.vmem [#allocation5], 184
    %v43 = vld [vmem:[%s42] sm:$0xff]
    %s44 = scalar_lea.vmem [#allocation5], 248
    %v45 = vld [vmem:[%s44] sm:$0xff]
    %v46 = vld [vmem:[#allocation5] sm:$0xff]
    %s47 = scalar_lea.vmem [#allocation5], 8
    %v48 = vld [vmem:[%s47] sm:$0xff]
    %s49 = scalar_lea.vmem [#allocation5], 16
    %v50 = vld [vmem:[%s49] sm:$0xff]
    %s51 = scalar_lea.vmem [#allocation5], 64
    %v52 = vld [vmem:[%s51] sm:$0xff]
    %s53 = scalar_lea.vmem [#allocation5], 72
    %v54 = vld [vmem:[%s53] sm:$0xff]
    %s55 = scalar_lea.vmem [#allocation5], 80
    %v56 = vld [vmem:[%s55] sm:$0xff]
    %s57 = scalar_lea.vmem [#allocation5], 88
    %v58 = vld [vmem:[%s57] sm:$0xff]
    %s59 = scalar_lea.vmem [#allocation5], 96
    %v60 = vld [vmem:[%s59] sm:$0xff]
    %s61 = scalar_lea.vmem [#allocation5], 128
    %v62 = vld [vmem:[%s61] sm:$0xff]
    %s63 = scalar_lea.vmem [#allocation5], 136
    %v64 = vld [vmem:[%s63] sm:$0xff]
    %s65 = scalar_lea.vmem [#allocation5], 144
    %v66 = vld [vmem:[%s65] sm:$0xff]
    %s67 = scalar_lea.vmem [#allocation5], 152
    %v68 = vld [vmem:[%s67] sm:$0xff]
    %s69 = scalar_lea.vmem [#allocation5], 160
    %v70 = vld [vmem:[%s69] sm:$0xff]
    %s71 = scalar_lea.vmem [#allocation5], 192
    %v72 = vld [vmem:[%s71] sm:$0xff]
    %s73 = scalar_lea.vmem [#allocation5], 200
    %v74 = vld [vmem:[%s73] sm:$0xff]
    %s75 = scalar_lea.vmem [#allocation5], 208
    %v76 = vld [vmem:[%s75] sm:$0xff]
    %s77 = scalar_lea.vmem [#allocation5], 216
    %v78 = vld [vmem:[%s77] sm:$0xff]
    %s79 = scalar_lea.vmem [#allocation5], 224
    %v80 = vld [vmem:[%s79] sm:$0xff]
    %v81 = vld [vmem:[#allocation2] sm:$0x7]
    %v82 = vlaneseq
    %v83 = vshrl.u32 %v82, 7
    %v84 = vsub.s32 0, %v83
    %v85 = vrot.slane %v81, %v84
    %v86 = vmul.f32 %v46, %v85
    %v87 = vadd.f32 %v39, %v86
    %v88 = vlaneseq
    %v89 = vshrl.u32 %v88, 7
    %v90 = vsub.s32 1, %v89
    %v91 = vrot.slane %v81, %v90
    %v92 = vmul.f32 %v48, %v91
    %v93 = vadd.f32 %v87, %v92
    %v94 = vlaneseq
    %v95 = vshrl.u32 %v94, 7
    %v96 = vsub.s32 2, %v95
    %v97 = vrot.slane %v81, %v96
    %v98 = vmul.f32 %v50, %v97
    %v99 = vadd.f32 %v93, %v98
    %v100 = vmax.f32 %v99, 0.0
    %v101 = vlaneseq
    %v102 = vshrl.u32 %v101, 7
    %v103 = vsub.s32 0, %v102
    %v104 = vrot.slane %v100, %v103
    %v105 = vmul.f32 %v52, %v104
    %v106 = vadd.f32 %v41, %v105
    %v107 = vlaneseq
    %v108 = vshrl.u32 %v107, 7
    %v109 = vsub.s32 1, %v108
    %v110 = vrot.slane %v100, %v109
    %v111 = vmul.f32 %v54, %v110
    %v112 = vadd.f32 %v106, %v111
    %v113 = vlaneseq
    %v114 = vshrl.u32 %v113, 7
    %v115 = vsub.s32 2, %v114
    %v116 = vrot.slane %v100, %v115
    %v117 = vmul.f32 %v56, %v116
    %v118 = vadd.f32 %v112, %v117
    %v119 = vlaneseq
    %v120 = vshrl.u32 %v119, 7
    %v121 = vsub.s32 3, %v120
    %v122 = vrot.slane %v100, %v121
    %v123 = vmul.f32 %v58, %v122
    %v124 = vadd.f32 %v118, %v123
    %v125 = vlaneseq
    %v126 = vshrl.u32 %v125, 7
    %v127 = vsub.s32 4, %v126
    %v128 = vrot.slane %v100, %v127
    %v129 = vmul.f32 %v60, %v128
    %v130 = vadd.f32 %v124, %v129
    %v131 = vmax.f32 %v130, 0.0
    %v132 = vlaneseq
    %v133 = vshrl.u32 %v132, 7
    %v134 = vsub.s32 0, %v133
    %v135 = vrot.slane %v131, %v134
    %v136 = vmul.f32 %v62, %v135
    %v137 = vadd.f32 %v43, %v136
    %v138 = vlaneseq
    %v139 = vshrl.u32 %v138, 7
    %v140 = vsub.s32 1, %v139
    %v141 = vrot.slane %v131, %v140
    %v142 = vmul.f32 %v64, %v141
    %v143 = vadd.f32 %v137, %v142
    %v144 = vlaneseq
    %v145 = vshrl.u32 %v144, 7
    %v146 = vsub.s32 2, %v145
    %v147 = vrot.slane %v131, %v146
    %v148 = vmul.f32 %v66, %v147
    %v149 = vadd.f32 %v143, %v148
    %v150 = vlaneseq
    %v151 = vshrl.u32 %v150, 7
    %v152 = vsub.s32 3, %v151
    %v153 = vrot.slane %v131, %v152
    %v154 = vmul.f32 %v68, %v153
    %v155 = vadd.f32 %v149, %v154
    %v156 = vlaneseq
    %v157 = vshrl.u32 %v156, 7
    %v158 = vsub.s32 4, %v157
    %v159 = vrot.slane %v131, %v158
    %v160 = vmul.f32 %v70, %v159
    %v161 = vadd.f32 %v155, %v160
    %v162 = vmax.f32 %v161, 0.0
    %v163 = vlaneseq
    %v164 = vshrl.u32 %v163, 7
    %v165 = vsub.s32 0, %v164
    %v166 = vrot.slane %v162, %v165
    %v167 = vmul.f32 %v72, %v166
    %v168 = vadd.f32 %v45, %v167
    %v169 = vlaneseq
    %v170 = vshrl.u32 %v169, 7
    %v171 = vsub.s32 1, %v170
    %v172 = vrot.slane %v162, %v171
    %v173 = vmul.f32 %v74, %v172
    %v174 = vadd.f32 %v168, %v173
    %v175 = vlaneseq
    %v176 = vshrl.u32 %v175, 7
    %v177 = vsub.s32 2, %v176
    %v178 = vrot.slane %v162, %v177
    %v179 = vmul.f32 %v76, %v178
    %v180 = vadd.f32 %v174, %v179
    %v181 = vlaneseq
    %v182 = vshrl.u32 %v181, 7
    %v183 = vsub.s32 3, %v182
    %v184 = vrot.slane %v162, %v183
    %v185 = vmul.f32 %v78, %v184
    %v186 = vadd.f32 %v180, %v185
    %v187 = vlaneseq
    %v188 = vshrl.u32 %v187, 7
    %v189 = vsub.s32 4, %v188
    %v190 = vrot.slane %v162, %v189
    %v191 = vmul.f32 %v80, %v190
    %v192 = vadd.f32 %v186, %v191
    %193 = vst [vmem:[#allocation7] sm:$0x7] %v192
    // Predicated region
    $region18: #{tpu_custom_call.1} parent=1 // pred_check
      _
    $region19: #{tpu_custom_call.1} parent=1 // pred_check_branch
      %195 = sbr.rel (0) target = $region21
    $region20: #{tpu_custom_call.1} parent=1 // pred_region
      %s197 = ssub.s32 64, 64
      %198 = vsyncadd [#allocation4], %s197
      %s200 = sshll.u32 [#allocation7], 4
      %s201 = int_to_ptr.vmem [resolvable:$true] %s200
      %203 = dma.vmem_to_hbm [thread:$0]  %s201, 64, %s2, [#allocation4]
    $region21: #{tpu_custom_call.1} parent=1 // pred_fallthru
      _
    // Predicated region
    $region22: #{tpu_custom_call.1} parent=1 // pred_check
      _
    $region23: #{tpu_custom_call.1} parent=1 // pred_check_branch
      %205 = sbr.rel (0) target = $region25
    $region24: #{tpu_custom_call.1} parent=1 // pred_region
      %206 = dma.done [#allocation4], 64
    $region25: #{tpu_custom_call.1} parent=1 // pred_fallthru
      _
    %207 = vsyncpa [#allocation3], 1
    %208 = vsyncpa [#allocation6], 1
    %209 = vsyncpa [#allocation4], 1

</llo_original>
